<compile_context>
chip_gen: v6e
topology: v6e:2x2x1
jax: 0.10.0
libtpu: 0.0.40
codegen_flags: <defaults>
</compile_context>

<pallas_src>
import jax
import jax.numpy as jnp
from jax.experimental import pallas as pl
from jax.experimental.pallas import tpu as pltpu

H1_PAD = 512   # 500 -> 512 (lane multiple)
H2_PAD = 128   # 100 -> 128 (lane multiple)


def mlp_kernel(x_ref, w1_ref, b1_ref, w2_ref, b2_ref, w3_ref, b3_ref, o_ref):
    # TODO(synk): dropout(p=0.2) is identity in eval mode; training-mode RNG
    # matching PyTorch is not reproducible, so it is omitted.
    x = x_ref[...]                                            # (TB, 12)

    h1 = jnp.dot(x, w1_ref[...], preferred_element_type=jnp.float32)
    h1 = jnp.maximum(h1 + b1_ref[...], 0.0)                   # ReLU(fc1), (TB, 512)

    h2 = jnp.dot(h1, w2_ref[...], preferred_element_type=jnp.float32)
    h2 = jnp.maximum(h2 + b2_ref[...], 0.0)                   # ReLU(fc2), (TB, 128)

    # fc3 (out width 1): do it on the VPU/XLU instead of a 1-column MXU matmul.
    h3 = jnp.sum(h2 * w3_ref[...], axis=-1, keepdims=True) + b3_ref[...]
    o_ref[...] = h3.astype(o_ref.dtype)                       # (TB, 1)


def mlp_forward(x, w1, b1, w2, b2, w3_row, b3, *, tb=256):
    """x: (B, 12); weights are padded: w1 (12,512), b1 (1,512), w2 (512,128),
    b2 (1,128), w3_row (1,128), b3 (1,1)."""
    B, d_in = x.shape
    b_pad = pl.cdiv(B, tb) * tb
    if b_pad != B:
        x = jnp.pad(x, ((0, b_pad - B), (0, 0)))
    grid = (b_pad // tb,)

    resident = lambda arr: pl.BlockSpec(arr.shape, lambda i: (0, 0))

    out = pl.pallas_call(
        mlp_kernel,
        out_shape=jax.ShapeDtypeStruct((b_pad, 1), jnp.float32),
        grid=grid,
        in_specs=[
            pl.BlockSpec((tb, d_in), lambda i: (i, 0)),   # x tile, pipelined
            resident(w1), resident(b1),                   # weights stay in VMEM
            resident(w2), resident(b2),
            resident(w3_row), resident(b3),
        ],
        out_specs=pl.BlockSpec((tb, 1), lambda i: (i, 0)),
        compiler_params=pltpu.CompilerParams(
            dimension_semantics=("parallel",),
        ),
    )(x, w1, b1, w2, b2, w3_row, b3)
    return out[:B]


def init_params(key):
    # Deterministic init mimicking nn.Linear's U(-1/sqrt(fan_in), 1/sqrt(fan_in)).
    dims = [(12, 500), (500, 100), (100, 1)]
    params = []
    for fan_in, fan_out in dims:
        kw, kb, key = jax.random.split(key, 3)
        bound = 1.0 / jnp.sqrt(jnp.float32(fan_in))
        # Stored as (in, out) == transpose of PyTorch's (out, in) weight.
        w = jax.random.uniform(kw, (fan_in, fan_out), jnp.float32, -bound, bound)
        b = jax.random.uniform(kb, (1, fan_out), jnp.float32, -bound, bound)
        params += [w, b]
    return params


def pad_params(w1, b1, w2, b2, w3, b3):
    """Zero-pad hidden dims to lane multiples; reshape fc3 weight to a row."""
    w1p = jnp.pad(w1, ((0, 0), (0, H1_PAD - w1.shape[1])))          # (12, 512)
    b1p = jnp.pad(b1, ((0, 0), (0, H1_PAD - b1.shape[1])))          # (1, 512)
    w2p = jnp.pad(w2, ((0, H1_PAD - w2.shape[0]),
                       (0, H2_PAD - w2.shape[1])))                  # (512, 128)
    b2p = jnp.pad(b2, ((0, 0), (0, H2_PAD - b2.shape[1])))          # (1, 128)
    w3p = jnp.pad(w3.T, ((0, 0), (0, H2_PAD - w3.shape[0])))        # (1, 128)
    b3p = b3.reshape(1, 1)                                          # (1, 1)
    return w1p, b1p, w2p, b2p, w3p, b3p


if __name__ == "__main__":
    key = jax.random.PRNGKey(0)
    kx, kp = jax.random.split(key)

    B = 8                          # small batch (demo); kernel tiles/pads to TB
    x = jax.random.normal(kx, (B, 12), dtype=jnp.float32)

    w1, b1, w2, b2, w3, b3 = init_params(kp)
    w1p, b1p, w2p, b2p, w3p, b3p = pad_params(w1, b1, w2, b2, w3, b3)

    out = mlp_forward(x, w1p, b1p, w2p, b2p, w3p, b3p, tb=128)
    jax.block_until_ready(out)

    # Sanity check against plain-JAX reference using the UNPADDED weights.
    ref = x
    ref = jnp.maximum(ref @ w1 + b1, 0.0)
    ref = jnp.maximum(ref @ w2 + b2, 0.0)
    ref = ref @ w3 + b3
    assert out.shape == (B, 1)
    assert jnp.allclose(out, ref, atol=1e-5, rtol=1e-5)

    print("KERNEL_OK")
</pallas_src>

<mosaic_0001>
module attributes {stable_mosaic.version = 11 : i64} {
  func.func @mlp_kernel(%arg0: i32, %arg1: memref<128x12xf32, #tpu.memory_space<vmem>>, %arg2: memref<12x512xf32, #tpu.memory_space<vmem>>, %arg3: memref<1x512xf32, #tpu.memory_space<vmem>>, %arg4: memref<512x128xf32, #tpu.memory_space<vmem>>, %arg5: memref<1x128xf32, #tpu.memory_space<vmem>>, %arg6: memref<1x128xf32, #tpu.memory_space<vmem>>, %arg7: memref<1x1xf32, #tpu.memory_space<vmem>>, %arg8: memref<128x1xf32, #tpu.memory_space<vmem>>) attributes {dimension_semantics = [#tpu.dimension_semantics<parallel>], iteration_bounds = array<i64: 1>, scalar_prefetch = 0 : i64, scratch_operands = 0 : i64, tpu.core_type = #tpu.core_type<tc>, window_params = [{transform_indices = @transform_0, window_bounds = array<i64: 128, 12>}, {pipeline_mode = #tpu.pipeline_mode<synchronous>, transform_indices = @transform_1, window_bounds = array<i64: 12, 512>}, {pipeline_mode = #tpu.pipeline_mode<synchronous>, transform_indices = @transform_2, window_bounds = array<i64: 1, 512>}, {pipeline_mode = #tpu.pipeline_mode<synchronous>, transform_indices = @transform_3, window_bounds = array<i64: 512, 128>}, {pipeline_mode = #tpu.pipeline_mode<synchronous>, transform_indices = @transform_4, window_bounds = array<i64: 1, 128>}, {pipeline_mode = #tpu.pipeline_mode<synchronous>, transform_indices = @transform_5, window_bounds = array<i64: 1, 128>}, {pipeline_mode = #tpu.pipeline_mode<synchronous>, transform_indices = @transform_6, window_bounds = array<i64: 1, 1>}, {transform_indices = @transform_7, window_bounds = array<i64: 128, 1>}]} {
    %c0 = arith.constant 0 : index
    %c0_0 = arith.constant 0 : index
    %0 = vector.load %arg1[%c0, %c0_0] : memref<128x12xf32, #tpu.memory_space<vmem>>, vector<128x12xf32>
    %c0_1 = arith.constant 0 : index
    %c0_2 = arith.constant 0 : index
    %1 = vector.load %arg2[%c0_1, %c0_2] : memref<12x512xf32, #tpu.memory_space<vmem>>, vector<12x512xf32>
    %cst = arith.constant dense<0.000000e+00> : vector<128x512xf32>
    %2 = tpu.matmul %0, %1, %cst {dimension_numbers = #tpu.dot_dimension_numbers<[1], [0], [0], [1], [0, 0, 1, 1], [], []>} : vector<128x12xf32>, vector<12x512xf32>, vector<128x512xf32> -> vector<128x512xf32>
    %c0_3 = arith.constant 0 : index
    %c0_4 = arith.constant 0 : index
    %3 = vector.load %arg3[%c0_3, %c0_4] : memref<1x512xf32, #tpu.memory_space<vmem>>, vector<1x512xf32>
    %4 = vector.broadcast %3 : vector<1x512xf32> to vector<128x512xf32>
    %5 = arith.addf %2, %4 : vector<128x512xf32>
    %cst_5 = arith.constant 0.000000e+00 : f32
    %6 = vector.broadcast %cst_5 : f32 to vector<128x512xf32>
    %7 = arith.maximumf %5, %6 : vector<128x512xf32>
    %c0_6 = arith.constant 0 : index
    %c0_7 = arith.constant 0 : index
    %8 = vector.load %arg4[%c0_6, %c0_7] : memref<512x128xf32, #tpu.memory_space<vmem>>, vector<512x128xf32>
    %cst_8 = arith.constant dense<0.000000e+00> : vector<128x128xf32>
    %9 = tpu.matmul %7, %8, %cst_8 {dimension_numbers = #tpu.dot_dimension_numbers<[1], [0], [0], [1], [0, 0, 1, 1], [], []>} : vector<128x512xf32>, vector<512x128xf32>, vector<128x128xf32> -> vector<128x128xf32>
    %c0_9 = arith.constant 0 : index
    %c0_10 = arith.constant 0 : index
    %10 = vector.load %arg5[%c0_9, %c0_10] : memref<1x128xf32, #tpu.memory_space<vmem>>, vector<1x128xf32>
    %11 = vector.broadcast %10 : vector<1x128xf32> to vector<128x128xf32>
    %12 = arith.addf %9, %11 : vector<128x128xf32>
    %cst_11 = arith.constant 0.000000e+00 : f32
    %13 = vector.broadcast %cst_11 : f32 to vector<128x128xf32>
    %14 = arith.maximumf %12, %13 : vector<128x128xf32>
    %c0_12 = arith.constant 0 : index
    %c0_13 = arith.constant 0 : index
    %15 = vector.load %arg6[%c0_12, %c0_13] : memref<1x128xf32, #tpu.memory_space<vmem>>, vector<1x128xf32>
    %16 = vector.broadcast %15 : vector<1x128xf32> to vector<128x128xf32>
    %17 = arith.mulf %14, %16 : vector<128x128xf32>
    %cst_14 = arith.constant dense<0.000000e+00> : vector<128xf32>
    %18 = vector.multi_reduction <add>, %17, %cst_14 [1] : vector<128x128xf32> to vector<128xf32>
    %19 = vector.shape_cast %18 : vector<128xf32> to vector<128x1xf32>
    %c0_15 = arith.constant 0 : index
    %c0_16 = arith.constant 0 : index
    %20 = vector.load %arg7[%c0_15, %c0_16] : memref<1x1xf32, #tpu.memory_space<vmem>>, vector<1x1xf32>
    %21 = vector.broadcast %20 : vector<1x1xf32> to vector<128x1xf32>
    %22 = arith.addf %19, %21 : vector<128x1xf32>
    %c0_17 = arith.constant 0 : index
    %c0_18 = arith.constant 0 : index
    %23 = vector.load %arg8[%c0_17, %c0_18] : memref<128x1xf32, #tpu.memory_space<vmem>>, vector<128x1xf32>
    tpu.vector_store %arg8[%c0_17, %c0_18], %22 {strides = array<i32>} : memref<128x1xf32, #tpu.memory_space<vmem>>, vector<128x1xf32>,
    return
  }
  func.func @transform_0(%arg0: i32) -> (i32, i32) {
    %c0_i32 = arith.constant 0 : i32
    %c0_i32_0 = arith.constant 0 : i32
    return %arg0, %c0_i32 : i32, i32
  }
  func.func @transform_1(%arg0: i32) -> (i32, i32) {
    %c0_i32 = arith.constant 0 : i32
    %c0_i32_0 = arith.constant 0 : i32
    %c0_i32_1 = arith.constant 0 : i32
    return %c0_i32, %c0_i32_0 : i32, i32
  }
  func.func @transform_2(%arg0: i32) -> (i32, i32) {
    %c0_i32 = arith.constant 0 : i32
    %c0_i32_0 = arith.constant 0 : i32
    %c0_i32_1 = arith.constant 0 : i32
    return %c0_i32, %c0_i32_0 : i32, i32
  }
  func.func @transform_3(%arg0: i32) -> (i32, i32) {
    %c0_i32 = arith.constant 0 : i32
    %c0_i32_0 = arith.constant 0 : i32
    %c0_i32_1 = arith.constant 0 : i32
    return %c0_i32, %c0_i32_0 : i32, i32
  }
  func.func @transform_4(%arg0: i32) -> (i32, i32) {
    %c0_i32 = arith.constant 0 : i32
    %c0_i32_0 = arith.constant 0 : i32
    %c0_i32_1 = arith.constant 0 : i32
    return %c0_i32, %c0_i32_0 : i32, i32
  }
  func.func @transform_5(%arg0: i32) -> (i32, i32) {
    %c0_i32 = arith.constant 0 : i32
    %c0_i32_0 = arith.constant 0 : i32
    %c0_i32_1 = arith.constant 0 : i32
    return %c0_i32, %c0_i32_0 : i32, i32
  }
  func.func @transform_6(%arg0: i32) -> (i32, i32) {
    %c0_i32 = arith.constant 0 : i32
    %c0_i32_0 = arith.constant 0 : i32
    %c0_i32_1 = arith.constant 0 : i32
    return %c0_i32, %c0_i32_0 : i32, i32
  }
  func.func @transform_7(%arg0: i32) -> (i32, i32) {
    %c0_i32 = arith.constant 0 : i32
    %c0_i32_0 = arith.constant 0 : i32
    return %arg0, %c0_i32 : i32, i32
  }
}

</mosaic_0001>

<llo_original>
// kernel: tpu_custom_call.1
$region0: #{tpu_custom_call.1}
  #allocation0 [shape = 'u32[]', space=smem, size = 0x4, offset = 0x4, fixed_abs, tag = 'smem constant byte address 0x4 - core index']
  #allocation1 [shape = 'u32[144,128]{1,0:T(1,128)}', space=vmem, size = 0x12000, scoped, tag = 'internal scratch']
  #allocation2 [shape = 'f32[1,1]{1,0:T(1,128)S(1)}', space=vmem, size = 0x200, scoped, tag = 'scoped memory for tpu_custom_call.1']
  %s0 = inlined_call_operand.vmem [shape: f32[128,12], index: 0, kind: input, shape index: {}]
  %s1 = inlined_call_operand.vmem [shape: f32[12,512], index: 1, kind: input, shape index: {}]
  %s2 = inlined_call_operand.vmem [shape: f32[1,512], index: 2, kind: input, shape index: {}]
  %s3 = inlined_call_operand.hbm [shape: f32[512,128], index: 3, kind: input, shape index: {}]
  %s4 = inlined_call_operand.vmem [shape: f32[1,128], index: 4, kind: input, shape index: {}]
  %s5 = inlined_call_operand.vmem [shape: f32[1,128], index: 5, kind: input, shape index: {}]
  %s6 = inlined_call_operand.<no memory space> [shape: f32[1,1], index: 6, kind: input, shape index: {}]
  %s7 = inlined_call_operand.vmem [shape: f32[128,1], index: 7, kind: output, shape index: {}]
  %s8 = sld [smem:[#allocation0]]
  $region42: #{tpu_custom_call.1} parent=0
    _
  %s10 = ssub.s32 1, %s8
  %s11 = scalar_select 0, %s10, %s8
  %v12 = vstv %s6
  %13 = vst [vmem:[#allocation2] sm:$0x1] %v12
  $region1: #{tpu_custom_call.1} parent=0
    #allocation3 [shape = 'u8[262144]{0}', space=vmem, size = 0x40000, scoped, tag = 'input window, operand 3, single buffered']
    #allocation4 [shape = 's32[1]{0}', space=sflag, size = 0x4, scoped, tag = 'scoped memory for tpu_custom_call.1']
    %14 = vsyncpa [#allocation4], 0
    // Predicated region
    $region2: #{tpu_custom_call.1} parent=1 // pred_check
      _
    $region3: #{tpu_custom_call.1} parent=1 // pred_check_branch
      %16 = sbr.rel (0) target = $region5
    $region4: #{tpu_custom_call.1} parent=1 // pred_region
      _
    $region5: #{tpu_custom_call.1} parent=1 // pred_fallthru
      _
    // Predicated region
    $region6: #{tpu_custom_call.1} parent=1 // pred_check
      _
    $region7: #{tpu_custom_call.1} parent=1 // pred_check_branch
      %18 = sbr.rel (0) target = $region9
    $region8: #{tpu_custom_call.1} parent=1 // pred_region
      _
    $region9: #{tpu_custom_call.1} parent=1 // pred_fallthru
      _
    // Predicated region
    $region10: #{tpu_custom_call.1} parent=1 // pred_check
      _
    $region11: #{tpu_custom_call.1} parent=1 // pred_check_branch
      %20 = sbr.rel (0) target = $region13
    $region12: #{tpu_custom_call.1} parent=1 // pred_region
      _
    $region13: #{tpu_custom_call.1} parent=1 // pred_fallthru
      _
    // Predicated region
    $region14: #{tpu_custom_call.1} parent=1 // pred_check
      _
    $region15: #{tpu_custom_call.1} parent=1 // pred_check_branch
      %22 = sbr.rel (0) target = $region17
    $region16: #{tpu_custom_call.1} parent=1 // pred_region
      %s24 = ssub.s32 8192, 8192
      %25 = vsyncadd [#allocation4], %s24
      %s26 = sshll.u32 [#allocation3], 4
      %s27 = int_to_ptr.vmem [resolvable:$true] %s26
      %32 = dma.hbm_to_vmem [thread:$0]  %s3, 8192, %s27, [#allocation4], 128, 128, 8
    $region17: #{tpu_custom_call.1} parent=1 // pred_fallthru
      _
    // Predicated region
    $region18: #{tpu_custom_call.1} parent=1 // pred_check
      _
    $region19: #{tpu_custom_call.1} parent=1 // pred_check_branch
      %34 = sbr.rel (0) target = $region21
    $region20: #{tpu_custom_call.1} parent=1 // pred_region
      _
    $region21: #{tpu_custom_call.1} parent=1 // pred_fallthru
      _
    // Predicated region
    $region22: #{tpu_custom_call.1} parent=1 // pred_check
      _
    $region23: #{tpu_custom_call.1} parent=1 // pred_check_branch
      %36 = sbr.rel (0) target = $region25
    $region24: #{tpu_custom_call.1} parent=1 // pred_region
      _
    $region25: #{tpu_custom_call.1} parent=1 // pred_fallthru
      _
    // Predicated region
    $region26: #{tpu_custom_call.1} parent=1 // pred_check
      _
    $region27: #{tpu_custom_call.1} parent=1 // pred_check_branch
      %38 = sbr.rel (0) target = $region29
    $region28: #{tpu_custom_call.1} parent=1 // pred_region
      _
    $region29: #{tpu_custom_call.1} parent=1 // pred_fallthru
      _
    // Predicated region
    $region30: #{tpu_custom_call.1} parent=1 // pred_check
      _
    $region31: #{tpu_custom_call.1} parent=1 // pred_check_branch
      %40 = sbr.rel (0) target = $region33
    $region32: #{tpu_custom_call.1} parent=1 // pred_region
      %41 = dma.done [#allocation4], 8192
    $region33: #{tpu_custom_call.1} parent=1 // pred_fallthru
      _
    %v42 = vld [vmem:[%s0] sm:$0xff]
    %v43 = vld [vmem:[%s0 + $0x8] sm:$0xff]
    %v44 = vld [vmem:[%s0 + $0x10] sm:$0xff]
    %v45 = vld [vmem:[%s0 + $0x18] sm:$0xff]
    %v46 = vld [vmem:[%s0 + $0x20] sm:$0xff]
    %v47 = vld [vmem:[%s0 + $0x28] sm:$0xff]
    %v48 = vld [vmem:[%s0 + $0x30] sm:$0xff]
    %v49 = vld [vmem:[%s0 + $0x38] sm:$0xff]
    %v50 = vld [vmem:[%s0 + $0x40] sm:$0xff]
    %v51 = vld [vmem:[%s0 + $0x48] sm:$0xff]
    %v52 = vld [vmem:[%s0 + $0x50] sm:$0xff]
    %v53 = vld [vmem:[%s0 + $0x58] sm:$0xff]
    %v54 = vld [vmem:[%s0 + $0x60] sm:$0xff]
    %v55 = vld [vmem:[%s0 + $0x68] sm:$0xff]
    %v56 = vld [vmem:[%s0 + $0x70] sm:$0xff]
    %v57 = vld [vmem:[%s0 + $0x78] sm:$0xff]
    %v58 = vld [vmem:[%s1] sm:$0xff]
    %v59 = vld [vmem:[%s1 + $0x8] sm:$0xff]
    %v60 = vld [vmem:[%s1 + $0x10] sm:$0xff]
    %v61 = vld [vmem:[%s1 + $0x18] sm:$0xff]
    %v62 = vld [vmem:[%s1 + $0x20] sm:$0xf]
    %v63 = vld [vmem:[%s1 + $0x28] sm:$0xf]
    %v64 = vld [vmem:[%s1 + $0x30] sm:$0xf]
    %v65 = vld [vmem:[%s1 + $0x38] sm:$0xf]
    %v66 = vld [vmem:[%s2] sm:$0xf]
    %v68 = vlaneseq
    %v69 = vshrl.u32 %v68, 7
    %v70 = vsub.s32 0, %v69
    %v71 = vrot.slane %v66, %v70
    %v72 = vlaneseq
    %v73 = vshrl.u32 %v72, 7
    %v74 = vsub.s32 1, %v73
    %v75 = vrot.slane %v66, %v74
    %v76 = vlaneseq
    %v77 = vshrl.u32 %v76, 7
    %v78 = vsub.s32 2, %v77
    %v79 = vrot.slane %v66, %v78
    %v80 = vlaneseq
    %v81 = vshrl.u32 %v80, 7
    %v82 = vsub.s32 3, %v81
    %v83 = vrot.slane %v66, %v82
    %vm88 = vcmask 97280
    %v90 = vsel %vm88, %v42, 0
    %v93 = vsel %vm88, %v43, 0
    %v96 = vsel %vm88, %v44, 0
    %v99 = vsel %vm88, %v45, 0
    %v102 = vsel %vm88, %v46, 0
    %v105 = vsel %vm88, %v47, 0
    %v108 = vsel %vm88, %v48, 0
    %v111 = vsel %vm88, %v49, 0
    %v114 = vsel %vm88, %v50, 0
    %v117 = vsel %vm88, %v51, 0
    %v120 = vsel %vm88, %v52, 0
    %v123 = vsel %vm88, %v53, 0
    %v126 = vsel %vm88, %v54, 0
    %v129 = vsel %vm88, %v55, 0
    %v132 = vsel %vm88, %v56, 0
    %v135 = vsel %vm88, %v57, 0
    %vm137 = vcmask 1043456
    %v139 = vsel %vm137, %v62, 0
    %v142 = vsel %vm137, %v63, 0
    %v145 = vsel %vm137, %v64, 0
    %v148 = vsel %vm137, %v65, 0
    %150 = vmatprep.subr.mxu0 0.0
    %151 = vmatpush1.msra.mxu0 0.0
    %152 = vmatprep.subr.mxu0 0.0
    %153 = vmatpush1.msra.mxu0 0.0
    %154 = vmatprep.subr.mxu0 0.0
    %155 = vmatpush1.msra.mxu0 0.0
    %156 = vmatprep.subr.mxu0 0.0
    %157 = vmatpush1.msra.mxu0 0.0
    %158 = vmatprep.subr.mxu0 0.0
    %159 = vmatpush1.msra.mxu0 0.0
    %160 = vmatprep.subr.mxu0 0.0
    %161 = vmatpush1.msra.mxu0 0.0
    %162 = vmatprep.subr.mxu0 0.0
    %163 = vmatpush1.msra.mxu0 0.0
    %164 = vmatprep.subr.mxu0 0.0
    %165 = vmatpush1.msra.mxu0 0.0
    %166 = vmatprep.subr.mxu0 0.0
    %167 = vmatpush1.msra.mxu0 0.0
    %168 = vmatprep.subr.mxu0 0.0
    %169 = vmatpush1.msra.mxu0 0.0
    %170 = vmatprep.subr.mxu0 0.0
    %171 = vmatpush1.msra.mxu0 0.0
    %172 = vmatprep.subr.mxu0 0.0
    %173 = vmatpush1.msra.mxu0 0.0
    %174 = vmatprep.subr.mxu0 0.0
    %175 = vmatpush1.msra.mxu0 0.0
    %176 = vmatprep.subr.mxu0 0.0
    %177 = vmatpush1.msra.mxu0 0.0
    %178 = vmatprep.subr.mxu0 %v142
    %179 = vmatpush1.msra.mxu0 %v139
    %180 = vmatprep.subr.mxu0 %v59
    %181 = vmatpush1.msra.mxu0 %v58
    %182 = vmatprep.subr.mxu0 0.0
    %183 = vmatpush2.msra.mxu0 0.0
    %184 = vmatprep.subr.mxu0 0.0
    %185 = vmatpush2.msra.mxu0 0.0
    %186 = vmatprep.subr.mxu0 0.0
    %187 = vmatpush2.msra.mxu0 0.0
    %188 = vmatprep.subr.mxu0 0.0
    %189 = vmatpush2.msra.mxu0 0.0
    %190 = vmatprep.subr.mxu0 0.0
    %191 = vmatpush2.msra.mxu0 0.0
    %192 = vmatprep.subr.mxu0 0.0
    %193 = vmatpush2.msra.mxu0 0.0
    %194 = vmatprep.subr.mxu0 0.0
    %195 = vmatpush2.msra.mxu0 0.0
    %196 = vmatprep.subr.mxu0 0.0
    %197 = vmatpush2.msra.mxu0 0.0
    %198 = vmatprep.subr.mxu0 0.0
    %199 = vmatpush2.msra.mxu0 0.0
    %200 = vmatprep.subr.mxu0 0.0
    %201 = vmatpush2.msra.mxu0 0.0
    %202 = vmatprep.subr.mxu0 0.0
    %203 = vmatpush2.msra.mxu0 0.0
    %204 = vmatprep.subr.mxu0 0.0
    %205 = vmatpush2.msra.mxu0 0.0
    %206 = vmatprep.subr.mxu0 0.0
    %207 = vmatpush2.msra.mxu0 0.0
    %208 = vmatprep.subr.mxu0 0.0
    %209 = vmatpush2.msra.mxu0 0.0
    %210 = vmatprep.subr.mxu0 0.0
    %211 = vmatpush2.msra.mxu0 0.0
    %212 = vmatprep.subr.mxu0 0.0
    %213 = vmatpush2.msra.mxu0 0.0
    %214 = vmatprep.mubr.f32.mxu0 0.0
    %215 = vmatmul.mubr.f32.gmra.mxu0 %v90
    %v216 = vpop.f32.mrf.mxu0
    %v217 = vadd.f32 %v71, %v216
    %v218 = vpop.f32.mrf.mxu0
    %v219 = vadd.f32 %v75, %v218
    %220 = vmatprep.mubr.f32.mxu0 0.0
    %221 = vmatmul.mubr.f32.gmra.mxu0 %v93
    %v222 = vpop.f32.mrf.mxu0
    %v223 = vadd.f32 %v71, %v222
    %v224 = vpop.f32.mrf.mxu0
    %v225 = vadd.f32 %v75, %v224
    %226 = vmatprep.mubr.f32.mxu0 0.0
    %227 = vmatmul.mubr.f32.gmra.mxu0 %v96
    %v228 = vpop.f32.mrf.mxu0
    %v229 = vadd.f32 %v71, %v228
    %v230 = vpop.f32.mrf.mxu0
    %v231 = vadd.f32 %v75, %v230
    %232 = vmatprep.mubr.f32.mxu0 0.0
    %233 = vmatmul.mubr.f32.gmra.mxu0 %v99
    %v234 = vpop.f32.mrf.mxu0
    %v235 = vadd.f32 %v71, %v234
    %v236 = vpop.f32.mrf.mxu0
    %v237 = vadd.f32 %v75, %v236
    %238 = vmatprep.mubr.f32.mxu0 0.0
    %239 = vmatmul.mubr.f32.gmra.mxu0 %v102
    %v240 = vpop.f32.mrf.mxu0
    %v241 = vadd.f32 %v71, %v240
    %v242 = vpop.f32.mrf.mxu0
    %v243 = vadd.f32 %v75, %v242
    %244 = vmatprep.mubr.f32.mxu0 0.0
    %245 = vmatmul.mubr.f32.gmra.mxu0 %v105
    %v246 = vpop.f32.mrf.mxu0
    %v247 = vadd.f32 %v71, %v246
    %v248 = vpop.f32.mrf.mxu0
    %v249 = vadd.f32 %v75, %v248
    %250 = vmatprep.mubr.f32.mxu0 0.0
    %251 = vmatmul.mubr.f32.gmra.mxu0 %v108
    %v252 = vpop.f32.mrf.mxu0
    %v253 = vadd.f32 %v71, %v252
    %v254 = vpop.f32.mrf.mxu0
    %v255 = vadd.f32 %v75, %v254
    %256 = vmatprep.mubr.f32.mxu0 0.0
    %257 = vmatmul.mubr.f32.gmra.mxu0 %v111
    %v258 = vpop.f32.mrf.mxu0
    %v259 = vadd.f32 %v71, %v258
    %v260 = vpop.f32.mrf.mxu0
    %v261 = vadd.f32 %v75, %v260
    %262 = vmatprep.mubr.f32.mxu0 0.0
    %263 = vmatmul.mubr.f32.gmra.mxu0 %v114
    %v264 = vpop.f32.mrf.mxu0
    %v265 = vadd.f32 %v71, %v264
    %v266 = vpop.f32.mrf.mxu0
    %v267 = vadd.f32 %v75, %v266
    %268 = vmatprep.mubr.f32.mxu0 0.0
    %269 = vmatmul.mubr.f32.gmra.mxu0 %v117
    %v270 = vpop.f32.mrf.mxu0
    %v271 = vadd.f32 %v71, %v270
    %v272 = vpop.f32.mrf.mxu0
    %v273 = vadd.f32 %v75, %v272
    %274 = vmatprep.mubr.f32.mxu0 0.0
    %275 = vmatmul.mubr.f32.gmra.mxu0 %v120
    %v276 = vpop.f32.mrf.mxu0
    %v277 = vadd.f32 %v71, %v276
    %v278 = vpop.f32.mrf.mxu0
    %v279 = vadd.f32 %v75, %v278
    %280 = vmatprep.mubr.f32.mxu0 0.0
    %281 = vmatmul.mubr.f32.gmra.mxu0 %v123
    %v282 = vpop.f32.mrf.mxu0
    %v283 = vadd.f32 %v71, %v282
    %v284 = vpop.f32.mrf.mxu0
    %v285 = vadd.f32 %v75, %v284
    %286 = vmatprep.mubr.f32.mxu0 0.0
    %287 = vmatmul.mubr.f32.gmra.mxu0 %v126
    %v288 = vpop.f32.mrf.mxu0
    %v289 = vadd.f32 %v71, %v288
    %v290 = vpop.f32.mrf.mxu0
    %v291 = vadd.f32 %v75, %v290
    %292 = vmatprep.mubr.f32.mxu0 0.0
    %293 = vmatmul.mubr.f32.gmra.mxu0 %v129
    %v294 = vpop.f32.mrf.mxu0
    %v295 = vadd.f32 %v71, %v294
    %v296 = vpop.f32.mrf.mxu0
    %v297 = vadd.f32 %v75, %v296
    %298 = vmatprep.mubr.f32.mxu0 0.0
    %299 = vmatmul.mubr.f32.gmra.mxu0 %v132
    %v300 = vpop.f32.mrf.mxu0
    %v301 = vadd.f32 %v71, %v300
    %v302 = vpop.f32.mrf.mxu0
    %v303 = vadd.f32 %v75, %v302
    %304 = vmatprep.mubr.f32.mxu0 0.0
    %305 = vmatmul.mubr.f32.gmra.mxu0 %v135
    %v306 = vpop.f32.mrf.mxu0
    %v307 = vadd.f32 %v71, %v306
    %v308 = vpop.f32.mrf.mxu0
    %v309 = vadd.f32 %v75, %v308
    %310 = vdwg.mxu0
    %311 = vmatprep.subr.mxu0 0.0
    %312 = vmatpush1.msra.mxu0 0.0
    %313 = vmatprep.subr.mxu0 0.0
    %314 = vmatpush1.msra.mxu0 0.0
    %315 = vmatprep.subr.mxu0 0.0
    %316 = vmatpush1.msra.mxu0 0.0
    %317 = vmatprep.subr.mxu0 0.0
    %318 = vmatpush1.msra.mxu0 0.0
    %319 = vmatprep.subr.mxu0 0.0
    %320 = vmatpush1.msra.mxu0 0.0
    %321 = vmatprep.subr.mxu0 0.0
    %322 = vmatpush1.msra.mxu0 0.0
    %323 = vmatprep.subr.mxu0 0.0
    %324 = vmatpush1.msra.mxu0 0.0
    %325 = vmatprep.subr.mxu0 0.0
    %326 = vmatpush1.msra.mxu0 0.0
    %327 = vmatprep.subr.mxu0 0.0
    %328 = vmatpush1.msra.mxu0 0.0
    %329 = vmatprep.subr.mxu0 0.0
    %330 = vmatpush1.msra.mxu0 0.0
    %331 = vmatprep.subr.mxu0 0.0
    %332 = vmatpush1.msra.mxu0 0.0
    %333 = vmatprep.subr.mxu0 0.0
    %334 = vmatpush1.msra.mxu0 0.0
    %335 = vmatprep.subr.mxu0 0.0
    %336 = vmatpush1.msra.mxu0 0.0
    %337 = vmatprep.subr.mxu0 0.0
    %338 = vmatpush1.msra.mxu0 0.0
    %339 = vmatprep.subr.mxu0 %v148
    %340 = vmatpush1.msra.mxu0 %v145
    %341 = vmatprep.subr.mxu0 %v61
    %342 = vmatpush1.msra.mxu0 %v60
    %343 = vmatprep.subr.mxu0 0.0
    %344 = vmatpush2.msra.mxu0 0.0
    %345 = vmatprep.subr.mxu0 0.0
    %346 = vmatpush2.msra.mxu0 0.0
    %347 = vmatprep.subr.mxu0 0.0
    %348 = vmatpush2.msra.mxu0 0.0
    %349 = vmatprep.subr.mxu0 0.0
    %350 = vmatpush2.msra.mxu0 0.0
    %351 = vmatprep.subr.mxu0 0.0
    %352 = vmatpush2.msra.mxu0 0.0
    %353 = vmatprep.subr.mxu0 0.0
    %354 = vmatpush2.msra.mxu0 0.0
    %355 = vmatprep.subr.mxu0 0.0
    %356 = vmatpush2.msra.mxu0 0.0
    %357 = vmatprep.subr.mxu0 0.0
    %358 = vmatpush2.msra.mxu0 0.0
    %359 = vmatprep.subr.mxu0 0.0
    %360 = vmatpush2.msra.mxu0 0.0
    %361 = vmatprep.subr.mxu0 0.0
    %362 = vmatpush2.msra.mxu0 0.0
    %363 = vmatprep.subr.mxu0 0.0
    %364 = vmatpush2.msra.mxu0 0.0
    %365 = vmatprep.subr.mxu0 0.0
    %366 = vmatpush2.msra.mxu0 0.0
    %367 = vmatprep.subr.mxu0 0.0
    %368 = vmatpush2.msra.mxu0 0.0
    %369 = vmatprep.subr.mxu0 0.0
    %370 = vmatpush2.msra.mxu0 0.0
    %371 = vmatprep.subr.mxu0 0.0
    %372 = vmatpush2.msra.mxu0 0.0
    %373 = vmatprep.subr.mxu0 0.0
    %374 = vmatpush2.msra.mxu0 0.0
    %375 = vmatprep.mubr.f32.mxu0 0.0
    %376 = vmatmul.mubr.f32.gmra.mxu0 %v90
    %v377 = vpop.f32.mrf.mxu0
    %v378 = vadd.f32 %v79, %v377
    %v379 = vpop.f32.mrf.mxu0
    %v380 = vadd.f32 %v83, %v379
    %381 = vmatprep.mubr.f32.mxu0 0.0
    %382 = vmatmul.mubr.f32.gmra.mxu0 %v93
    %v383 = vpop.f32.mrf.mxu0
    %v384 = vadd.f32 %v79, %v383
    %v385 = vpop.f32.mrf.mxu0
    %v386 = vadd.f32 %v83, %v385
    %387 = vmatprep.mubr.f32.mxu0 0.0
    %388 = vmatmul.mubr.f32.gmra.mxu0 %v96
    %v389 = vpop.f32.mrf.mxu0
    %v390 = vadd.f32 %v79, %v389
    %v391 = vpop.f32.mrf.mxu0
    %v392 = vadd.f32 %v83, %v391
    %393 = vmatprep.mubr.f32.mxu0 0.0
    %394 = vmatmul.mubr.f32.gmra.mxu0 %v99
    %v395 = vpop.f32.mrf.mxu0
    %v396 = vadd.f32 %v79, %v395
    %v397 = vpop.f32.mrf.mxu0
    %v398 = vadd.f32 %v83, %v397
    %399 = vmatprep.mubr.f32.mxu0 0.0
    %400 = vmatmul.mubr.f32.gmra.mxu0 %v102
    %v401 = vpop.f32.mrf.mxu0
    %v402 = vadd.f32 %v79, %v401
    %v403 = vpop.f32.mrf.mxu0
    %v404 = vadd.f32 %v83, %v403
    %405 = vmatprep.mubr.f32.mxu0 0.0
    %406 = vmatmul.mubr.f32.gmra.mxu0 %v105
    %v407 = vpop.f32.mrf.mxu0
    %v408 = vadd.f32 %v79, %v407
    %v409 = vpop.f32.mrf.mxu0
    %v410 = vadd.f32 %v83, %v409
    %411 = vmatprep.mubr.f32.mxu0 0.0
    %412 = vmatmul.mubr.f32.gmra.mxu0 %v108
    %v413 = vpop.f32.mrf.mxu0
    %v414 = vadd.f32 %v79, %v413
    %v415 = vpop.f32.mrf.mxu0
    %v416 = vadd.f32 %v83, %v415
    %417 = vmatprep.mubr.f32.mxu0 0.0
    %418 = vmatmul.mubr.f32.gmra.mxu0 %v111
    %v419 = vpop.f32.mrf.mxu0
    %v420 = vadd.f32 %v79, %v419
    %v421 = vpop.f32.mrf.mxu0
    %v422 = vadd.f32 %v83, %v421
    %423 = vmatprep.mubr.f32.mxu0 0.0
    %424 = vmatmul.mubr.f32.gmra.mxu0 %v114
    %v425 = vpop.f32.mrf.mxu0
    %v426 = vadd.f32 %v79, %v425
    %v427 = vpop.f32.mrf.mxu0
    %v428 = vadd.f32 %v83, %v427
    %429 = vmatprep.mubr.f32.mxu0 0.0
    %430 = vmatmul.mubr.f32.gmra.mxu0 %v117
    %v431 = vpop.f32.mrf.mxu0
    %v432 = vadd.f32 %v79, %v431
    %v433 = vpop.f32.mrf.mxu0
    %v434 = vadd.f32 %v83, %v433
    %435 = vmatprep.mubr.f32.mxu0 0.0
    %436 = vmatmul.mubr.f32.gmra.mxu0 %v120
    %v437 = vpop.f32.mrf.mxu0
    %v438 = vadd.f32 %v79, %v437
    %v439 = vpop.f32.mrf.mxu0
    %v440 = vadd.f32 %v83, %v439
    %441 = vmatprep.mubr.f32.mxu0 0.0
    %442 = vmatmul.mubr.f32.gmra.mxu0 %v123
    %v443 = vpop.f32.mrf.mxu0
    %v444 = vadd.f32 %v79, %v443
    %v445 = vpop.f32.mrf.mxu0
    %v446 = vadd.f32 %v83, %v445
    %447 = vmatprep.mubr.f32.mxu0 0.0
    %448 = vmatmul.mubr.f32.gmra.mxu0 %v126
    %v449 = vpop.f32.mrf.mxu0
    %v450 = vadd.f32 %v79, %v449
    %v451 = vpop.f32.mrf.mxu0
    %v452 = vadd.f32 %v83, %v451
    %453 = vmatprep.mubr.f32.mxu0 0.0
    %454 = vmatmul.mubr.f32.gmra.mxu0 %v129
    %v455 = vpop.f32.mrf.mxu0
    %v456 = vadd.f32 %v79, %v455
    %v457 = vpop.f32.mrf.mxu0
    %v458 = vadd.f32 %v83, %v457
    %459 = vmatprep.mubr.f32.mxu0 0.0
    %460 = vmatmul.mubr.f32.gmra.mxu0 %v132
    %v461 = vpop.f32.mrf.mxu0
    %v462 = vadd.f32 %v79, %v461
    %v463 = vpop.f32.mrf.mxu0
    %v464 = vadd.f32 %v83, %v463
    %465 = vmatprep.mubr.f32.mxu0 0.0
    %466 = vmatmul.mubr.f32.gmra.mxu0 %v135
    %v467 = vpop.f32.mrf.mxu0
    %v468 = vadd.f32 %v79, %v467
    %v469 = vpop.f32.mrf.mxu0
    %v470 = vadd.f32 %v83, %v469
    %471 = vdwg.mxu0
    %v472 = vmax.f32 %v217, 0.0
    %v473 = vmax.f32 %v219, 0.0
    %v474 = vmax.f32 %v378, 0.0
    %v475 = vmax.f32 %v380, 0.0
    %v476 = vmax.f32 %v223, 0.0
    %v477 = vmax.f32 %v225, 0.0
    %v478 = vmax.f32 %v384, 0.0
    %v479 = vmax.f32 %v386, 0.0
    %v480 = vmax.f32 %v229, 0.0
    %v481 = vmax.f32 %v231, 0.0
    %v482 = vmax.f32 %v390, 0.0
    %v483 = vmax.f32 %v392, 0.0
    %v484 = vmax.f32 %v235, 0.0
    %v485 = vmax.f32 %v237, 0.0
    %v486 = vmax.f32 %v396, 0.0
    %v487 = vmax.f32 %v398, 0.0
    %v488 = vmax.f32 %v241, 0.0
    %v489 = vmax.f32 %v243, 0.0
    %v490 = vmax.f32 %v402, 0.0
    %v491 = vmax.f32 %v404, 0.0
    %v492 = vmax.f32 %v247, 0.0
    %v493 = vmax.f32 %v249, 0.0
    %v494 = vmax.f32 %v408, 0.0
    %v495 = vmax.f32 %v410, 0.0
    %v496 = vmax.f32 %v253, 0.0
    %v497 = vmax.f32 %v255, 0.0
    %v498 = vmax.f32 %v414, 0.0
    %v499 = vmax.f32 %v416, 0.0
    %v500 = vmax.f32 %v259, 0.0
    %v501 = vmax.f32 %v261, 0.0
    %v502 = vmax.f32 %v420, 0.0
    %v503 = vmax.f32 %v422, 0.0
    %v504 = vmax.f32 %v265, 0.0
    %v505 = vmax.f32 %v267, 0.0
    %v506 = vmax.f32 %v426, 0.0
    %v507 = vmax.f32 %v428, 0.0
    %v508 = vmax.f32 %v271, 0.0
    %v509 = vmax.f32 %v273, 0.0
    %v510 = vmax.f32 %v432, 0.0
    %v511 = vmax.f32 %v434, 0.0
    %v512 = vmax.f32 %v277, 0.0
    %v513 = vmax.f32 %v279, 0.0
    %v514 = vmax.f32 %v438, 0.0
    %v515 = vmax.f32 %v440, 0.0
    %v516 = vmax.f32 %v283, 0.0
    %v517 = vmax.f32 %v285, 0.0
    %v518 = vmax.f32 %v444, 0.0
    %v519 = vmax.f32 %v446, 0.0
    %v520 = vmax.f32 %v289, 0.0
    %v521 = vmax.f32 %v291, 0.0
    %v522 = vmax.f32 %v450, 0.0
    %v523 = vmax.f32 %v452, 0.0
    %v524 = vmax.f32 %v295, 0.0
    %v525 = vmax.f32 %v297, 0.0
    %v526 = vmax.f32 %v456, 0.0
    %v527 = vmax.f32 %v458, 0.0
    %v528 = vmax.f32 %v301, 0.0
    %v529 = vmax.f32 %v303, 0.0
    %v530 = vmax.f32 %v462, 0.0
    %v531 = vmax.f32 %v464, 0.0
    %v532 = vmax.f32 %v307, 0.0
    %v533 = vmax.f32 %v309, 0.0
    %v534 = vmax.f32 %v468, 0.0
    %v535 = vmax.f32 %v470, 0.0
    %v536 = vld [vmem:[#allocation3] sm:$0xff]
    %v537 = vld [vmem:[#allocation3 + $0x8] sm:$0xff]
    %v538 = vld [vmem:[#allocation3 + $0x10] sm:$0xff]
    %v539 = vld [vmem:[#allocation3 + $0x18] sm:$0xff]
    %v540 = vld [vmem:[#allocation3 + $0x20] sm:$0xff]
    %v541 = vld [vmem:[#allocation3 + $0x28] sm:$0xff]
    %v542 = vld [vmem:[#allocation3 + $0x30] sm:$0xff]
    %v543 = vld [vmem:[#allocation3 + $0x38] sm:$0xff]
    %v544 = vld [vmem:[#allocation3 + $0x40] sm:$0xff]
    %v545 = vld [vmem:[#allocation3 + $0x48] sm:$0xff]
    %v546 = vld [vmem:[#allocation3 + $0x50] sm:$0xff]
    %v547 = vld [vmem:[#allocation3 + $0x58] sm:$0xff]
    %v548 = vld [vmem:[#allocation3 + $0x60] sm:$0xff]
    %v549 = vld [vmem:[#allocation3 + $0x68] sm:$0xff]
    %v550 = vld [vmem:[#allocation3 + $0x70] sm:$0xff]
    %v551 = vld [vmem:[#allocation3 + $0x78] sm:$0xff]
    %v552 = vld [vmem:[#allocation3 + $0x80] sm:$0xff]
    %v553 = vld [vmem:[#allocation3 + $0x88] sm:$0xff]
    %v554 = vld [vmem:[#allocation3 + $0x90] sm:$0xff]
    %v555 = vld [vmem:[#allocation3 + $0x98] sm:$0xff]
    %v556 = vld [vmem:[#allocation3 + $0xa0] sm:$0xff]
    %v557 = vld [vmem:[#allocation3 + $0xa8] sm:$0xff]
    %v558 = vld [vmem:[#allocation3 + $0xb0] sm:$0xff]
    %v559 = vld [vmem:[#allocation3 + $0xb8] sm:$0xff]
    %v560 = vld [vmem:[#allocation3 + $0xc0] sm:$0xff]
    %v561 = vld [vmem:[#allocation3 + $0xc8] sm:$0xff]
    %v562 = vld [vmem:[#allocation3 + $0xd0] sm:$0xff]
    %v563 = vld [vmem:[#allocation3 + $0xd8] sm:$0xff]
    %v564 = vld [vmem:[#allocation3 + $0xe0] sm:$0xff]
    %v565 = vld [vmem:[#allocation3 + $0xe8] sm:$0xff]
    %v566 = vld [vmem:[#allocation3 + $0xf0] sm:$0xff]
    %v567 = vld [vmem:[#allocation3 + $0xf8] sm:$0xff]
    %v568 = vld [vmem:[#allocation3 + $0x100] sm:$0xff]
    %v569 = vld [vmem:[#allocation3 + $0x108] sm:$0xff]
    %v570 = vld [vmem:[#allocation3 + $0x110] sm:$0xff]
    %v571 = vld [vmem:[#allocation3 + $0x118] sm:$0xff]
    %v572 = vld [vmem:[#allocation3 + $0x120] sm:$0xff]
    %v573 = vld [vmem:[#allocation3 + $0x128] sm:$0xff]
    %v574 = vld [vmem:[#allocation3 + $0x130] sm:$0xff]
    %v575 = vld [vmem:[#allocation3 + $0x138] sm:$0xff]
    %v576 = vld [vmem:[#allocation3 + $0x140] sm:$0xff]
    %v577 = vld [vmem:[#allocation3 + $0x148] sm:$0xff]
    %v578 = vld [vmem:[#allocation3 + $0x150] sm:$0xff]
    %v579 = vld [vmem:[#allocation3 + $0x158] sm:$0xff]
    %v580 = vld [vmem:[#allocation3 + $0x160] sm:$0xff]
    %v581 = vld [vmem:[#allocation3 + $0x168] sm:$0xff]
    %v582 = vld [vmem:[#allocation3 + $0x170] sm:$0xff]
    %v583 = vld [vmem:[#allocation3 + $0x178] sm:$0xff]
    %v584 = vld [vmem:[#allocation3 + $0x180] sm:$0xff]
    %v585 = vld [vmem:[#allocation3 + $0x188] sm:$0xff]
    %v586 = vld [vmem:[#allocation3 + $0x190] sm:$0xff]
    %v587 = vld [vmem:[#allocation3 + $0x198] sm:$0xff]
    %v588 = vld [vmem:[#allocation3 + $0x1a0] sm:$0xff]
    %v589 = vld [vmem:[#allocation3 + $0x1a8] sm:$0xff]
    %v590 = vld [vmem:[#allocation3 + $0x1b0] sm:$0xff]
    %v591 = vld [vmem:[#allocation3 + $0x1b8] sm:$0xff]
    %v592 = vld [vmem:[#allocation3 + $0x1c0] sm:$0xff]
    %v593 = vld [vmem:[#allocation3 + $0x1c8] sm:$0xff]
    %v594 = vld [vmem:[#allocation3 + $0x1d0] sm:$0xff]
    %v595 = vld [vmem:[#allocation3 + $0x1d8] sm:$0xff]
    %v596 = vld [vmem:[#allocation3 + $0x1e0] sm:$0xff]
    %v597 = vld [vmem:[#allocation3 + $0x1e8] sm:$0xff]
    %v598 = vld [vmem:[#allocation3 + $0x1f0] sm:$0xff]
    %v599 = vld [vmem:[#allocation3 + $0x1f8] sm:$0xff]
    %v600 = vld [vmem:[%s4] sm:$0x1]
    %v602 = vlaneseq
    %v603 = vshrl.u32 %v602, 7
    %v604 = vsub.s32 0, %v603
    %v605 = vrot.slane %v600, %v604
    %607 = vmatprep.subr.mxu0 0.0
    %608 = vmatpush1.msra.mxu0 %v551
    %609 = vmatprep.subr.mxu0 0.0
    %610 = vmatpush1.msra.mxu0 %v550
    %611 = vmatprep.subr.mxu0 0.0
    %612 = vmatpush1.msra.mxu0 %v549
    %613 = vmatprep.subr.mxu0 0.0
    %614 = vmatpush1.msra.mxu0 %v548
    %615 = vmatprep.subr.mxu0 0.0
    %616 = vmatpush1.msra.mxu0 %v547
    %617 = vmatprep.subr.mxu0 0.0
    %618 = vmatpush1.msra.mxu0 %v546
    %619 = vmatprep.subr.mxu0 0.0
    %620 = vmatpush1.msra.mxu0 %v545
    %621 = vmatprep.subr.mxu0 0.0
    %622 = vmatpush1.msra.mxu0 %v544
    %623 = vmatprep.subr.mxu0 0.0
    %624 = vmatpush1.msra.mxu0 %v543
    %625 = vmatprep.subr.mxu0 0.0
    %626 = vmatpush1.msra.mxu0 %v542
    %627 = vmatprep.subr.mxu0 0.0
    %628 = vmatpush1.msra.mxu0 %v541
    %629 = vmatprep.subr.mxu0 0.0
    %630 = vmatpush1.msra.mxu0 %v540
    %631 = vmatprep.subr.mxu0 0.0
    %632 = vmatpush1.msra.mxu0 %v539
    %633 = vmatprep.subr.mxu0 0.0
    %634 = vmatpush1.msra.mxu0 %v538
    %635 = vmatprep.subr.mxu0 0.0
    %636 = vmatpush1.msra.mxu0 %v537
    %637 = vmatprep.subr.mxu0 0.0
    %638 = vmatpush1.msra.mxu0 %v536
    %639 = vmatprep.subr.mxu0 0.0
    %640 = vmatpush2.msra.mxu0 %v567
    %641 = vmatprep.subr.mxu0 0.0
    %642 = vmatpush2.msra.mxu0 %v566
    %643 = vmatprep.subr.mxu0 0.0
    %644 = vmatpush2.msra.mxu0 %v565
    %645 = vmatprep.subr.mxu0 0.0
    %646 = vmatpush2.msra.mxu0 %v564
    %647 = vmatprep.subr.mxu0 0.0
    %648 = vmatpush2.msra.mxu0 %v563
    %649 = vmatprep.subr.mxu0 0.0
    %650 = vmatpush2.msra.mxu0 %v562
    %651 = vmatprep.subr.mxu0 0.0
    %652 = vmatpush2.msra.mxu0 %v561
    %653 = vmatprep.subr.mxu0 0.0
    %654 = vmatpush2.msra.mxu0 %v560
    %655 = vmatprep.subr.mxu0 0.0
    %656 = vmatpush2.msra.mxu0 %v559
    %657 = vmatprep.subr.mxu0 0.0
    %658 = vmatpush2.msra.mxu0 %v558
    %659 = vmatprep.subr.mxu0 0.0
    %660 = vmatpush2.msra.mxu0 %v557
    %661 = vmatprep.subr.mxu0 0.0
    %662 = vmatpush2.msra.mxu0 %v556
    %663 = vmatprep.subr.mxu0 0.0
    %664 = vmatpush2.msra.mxu0 %v555
    %665 = vmatprep.subr.mxu0 0.0
    %666 = vmatpush2.msra.mxu0 %v554
    %667 = vmatprep.subr.mxu0 0.0
    %668 = vmatpush2.msra.mxu0 %v553
    %669 = vmatprep.subr.mxu0 0.0
    %670 = vmatpush2.msra.mxu0 %v552
    %671 = vmatprep.mubr.f32.mxu0 %v473
    %672 = vmatmul.mubr.f32.gmra.mxu0 %v472
    %v673 = vpop.f32.mrf.mxu0
    %v674 = vadd.f32 %v605, %v673
    %v675 = vpop.f32.mrf.mxu0
    %676 = vmatprep.mubr.f32.mxu0 %v477
    %677 = vmatmul.mubr.f32.gmra.mxu0 %v476
    %v678 = vpop.f32.mrf.mxu0
    %v679 = vadd.f32 %v605, %v678
    %v680 = vpop.f32.mrf.mxu0
    %681 = vmatprep.mubr.f32.mxu0 %v481
    %682 = vmatmul.mubr.f32.gmra.mxu0 %v480
    %v683 = vpop.f32.mrf.mxu0
    %v684 = vadd.f32 %v605, %v683
    %v685 = vpop.f32.mrf.mxu0
    %686 = vmatprep.mubr.f32.mxu0 %v485
    %687 = vmatmul.mubr.f32.gmra.mxu0 %v484
    %v688 = vpop.f32.mrf.mxu0
    %v689 = vadd.f32 %v605, %v688
    %v690 = vpop.f32.mrf.mxu0
    %691 = vmatprep.mubr.f32.mxu0 %v489
    %692 = vmatmul.mubr.f32.gmra.mxu0 %v488
    %v693 = vpop.f32.mrf.mxu0
    %v694 = vadd.f32 %v605, %v693
    %v695 = vpop.f32.mrf.mxu0
    %696 = vmatprep.mubr.f32.mxu0 %v493
    %697 = vmatmul.mubr.f32.gmra.mxu0 %v492
    %v698 = vpop.f32.mrf.mxu0
    %v699 = vadd.f32 %v605, %v698
    %v700 = vpop.f32.mrf.mxu0
    %701 = vmatprep.mubr.f32.mxu0 %v497
    %702 = vmatmul.mubr.f32.gmra.mxu0 %v496
    %v703 = vpop.f32.mrf.mxu0
    %v704 = vadd.f32 %v605, %v703
    %v705 = vpop.f32.mrf.mxu0
    %706 = vmatprep.mubr.f32.mxu0 %v501
    %707 = vmatmul.mubr.f32.gmra.mxu0 %v500
    %v708 = vpop.f32.mrf.mxu0
    %v709 = vadd.f32 %v605, %v708
    %v710 = vpop.f32.mrf.mxu0
    %711 = vmatprep.mubr.f32.mxu0 %v505
    %712 = vmatmul.mubr.f32.gmra.mxu0 %v504
    %v713 = vpop.f32.mrf.mxu0
    %v714 = vadd.f32 %v605, %v713
    %v715 = vpop.f32.mrf.mxu0
    %716 = vmatprep.mubr.f32.mxu0 %v509
    %717 = vmatmul.mubr.f32.gmra.mxu0 %v508
    %v718 = vpop.f32.mrf.mxu0
    %v719 = vadd.f32 %v605, %v718
    %v720 = vpop.f32.mrf.mxu0
    %721 = vmatprep.mubr.f32.mxu0 %v513
    %722 = vmatmul.mubr.f32.gmra.mxu0 %v512
    %v723 = vpop.f32.mrf.mxu0
    %v724 = vadd.f32 %v605, %v723
    %v725 = vpop.f32.mrf.mxu0
    %726 = vmatprep.mubr.f32.mxu0 %v517
    %727 = vmatmul.mubr.f32.gmra.mxu0 %v516
    %v728 = vpop.f32.mrf.mxu0
    %v729 = vadd.f32 %v605, %v728
    %v730 = vpop.f32.mrf.mxu0
    %731 = vmatprep.mubr.f32.mxu0 %v521
    %732 = vmatmul.mubr.f32.gmra.mxu0 %v520
    %v733 = vpop.f32.mrf.mxu0
    %v734 = vadd.f32 %v605, %v733
    %v735 = vpop.f32.mrf.mxu0
    %736 = vmatprep.mubr.f32.mxu0 %v525
    %737 = vmatmul.mubr.f32.gmra.mxu0 %v524
    %v738 = vpop.f32.mrf.mxu0
    %v739 = vadd.f32 %v605, %v738
    %v740 = vpop.f32.mrf.mxu0
    %741 = vmatprep.mubr.f32.mxu0 %v529
    %742 = vmatmul.mubr.f32.gmra.mxu0 %v528
    %v743 = vpop.f32.mrf.mxu0
    %v744 = vadd.f32 %v605, %v743
    %v745 = vpop.f32.mrf.mxu0
    %746 = vmatprep.mubr.f32.mxu0 %v533
    %747 = vmatmul.mubr.f32.gmra.mxu0 %v532
    %v748 = vpop.f32.mrf.mxu0
    %v749 = vadd.f32 %v605, %v748
    %v750 = vpop.f32.mrf.mxu0
    %751 = vdwg.mxu0
    %752 = vmatprep.subr.mxu0 0.0
    %753 = vmatpush1.msra.mxu0 %v583
    %754 = vmatprep.subr.mxu0 0.0
    %755 = vmatpush1.msra.mxu0 %v582
    %756 = vmatprep.subr.mxu0 0.0
    %757 = vmatpush1.msra.mxu0 %v581
    %758 = vmatprep.subr.mxu0 0.0
    %759 = vmatpush1.msra.mxu0 %v580
    %760 = vmatprep.subr.mxu0 0.0
    %761 = vmatpush1.msra.mxu0 %v579
    %762 = vmatprep.subr.mxu0 0.0
    %763 = vmatpush1.msra.mxu0 %v578
    %764 = vmatprep.subr.mxu0 0.0
    %765 = vmatpush1.msra.mxu0 %v577
    %766 = vmatprep.subr.mxu0 0.0
    %767 = vmatpush1.msra.mxu0 %v576
    %768 = vmatprep.subr.mxu0 0.0
    %769 = vmatpush1.msra.mxu0 %v575
    %770 = vmatprep.subr.mxu0 0.0
    %771 = vmatpush1.msra.mxu0 %v574
    %772 = vmatprep.subr.mxu0 0.0
    %773 = vmatpush1.msra.mxu0 %v573
    %774 = vmatprep.subr.mxu0 0.0
    %775 = vmatpush1.msra.mxu0 %v572
    %776 = vmatprep.subr.mxu0 0.0
    %777 = vmatpush1.msra.mxu0 %v571
    %778 = vmatprep.subr.mxu0 0.0
    %779 = vmatpush1.msra.mxu0 %v570
    %780 = vmatprep.subr.mxu0 0.0
    %781 = vmatpush1.msra.mxu0 %v569
    %782 = vmatprep.subr.mxu0 0.0
    %783 = vmatpush1.msra.mxu0 %v568
    %784 = vmatprep.subr.mxu0 0.0
    %785 = vmatpush2.msra.mxu0 %v599
    %786 = vmatprep.subr.mxu0 0.0
    %787 = vmatpush2.msra.mxu0 %v598
    %788 = vmatprep.subr.mxu0 0.0
    %789 = vmatpush2.msra.mxu0 %v597
    %790 = vmatprep.subr.mxu0 0.0
    %791 = vmatpush2.msra.mxu0 %v596
    %792 = vmatprep.subr.mxu0 0.0
    %793 = vmatpush2.msra.mxu0 %v595
    %794 = vmatprep.subr.mxu0 0.0
    %795 = vmatpush2.msra.mxu0 %v594
    %796 = vmatprep.subr.mxu0 0.0
    %797 = vmatpush2.msra.mxu0 %v593
    %798 = vmatprep.subr.mxu0 0.0
    %799 = vmatpush2.msra.mxu0 %v592
    %800 = vmatprep.subr.mxu0 0.0
    %801 = vmatpush2.msra.mxu0 %v591
    %802 = vmatprep.subr.mxu0 0.0
    %803 = vmatpush2.msra.mxu0 %v590
    %804 = vmatprep.subr.mxu0 0.0
    %805 = vmatpush2.msra.mxu0 %v589
    %806 = vmatprep.subr.mxu0 0.0
    %807 = vmatpush2.msra.mxu0 %v588
    %808 = vmatprep.subr.mxu0 0.0
    %809 = vmatpush2.msra.mxu0 %v587
    %810 = vmatprep.subr.mxu0 0.0
    %811 = vmatpush2.msra.mxu0 %v586
    %812 = vmatprep.subr.mxu0 0.0
    %813 = vmatpush2.msra.mxu0 %v585
    %814 = vmatprep.subr.mxu0 0.0
    %815 = vmatpush2.msra.mxu0 %v584
    %816 = vmatprep.mubr.f32.mxu0 %v475
    %817 = vmatmul.mubr.f32.gmra.mxu0 %v474
    %v818 = vpop.f32.mrf.mxu0
    %v819 = vadd.f32 %v674, %v818
    %v820 = vpop.f32.mrf.mxu0
    %821 = vmatprep.mubr.f32.mxu0 %v479
    %822 = vmatmul.mubr.f32.gmra.mxu0 %v478
    %v823 = vpop.f32.mrf.mxu0
    %v824 = vadd.f32 %v679, %v823
    %v825 = vpop.f32.mrf.mxu0
    %826 = vmatprep.mubr.f32.mxu0 %v483
    %827 = vmatmul.mubr.f32.gmra.mxu0 %v482
    %v828 = vpop.f32.mrf.mxu0
    %v829 = vadd.f32 %v684, %v828
    %v830 = vpop.f32.mrf.mxu0
    %831 = vmatprep.mubr.f32.mxu0 %v487
    %832 = vmatmul.mubr.f32.gmra.mxu0 %v486
    %v833 = vpop.f32.mrf.mxu0
    %v834 = vadd.f32 %v689, %v833
    %v835 = vpop.f32.mrf.mxu0
    %836 = vmatprep.mubr.f32.mxu0 %v491
    %837 = vmatmul.mubr.f32.gmra.mxu0 %v490
    %v838 = vpop.f32.mrf.mxu0
    %v839 = vadd.f32 %v694, %v838
    %v840 = vpop.f32.mrf.mxu0
    %841 = vmatprep.mubr.f32.mxu0 %v495
    %842 = vmatmul.mubr.f32.gmra.mxu0 %v494
    %v843 = vpop.f32.mrf.mxu0
    %v844 = vadd.f32 %v699, %v843
    %v845 = vpop.f32.mrf.mxu0
    %846 = vmatprep.mubr.f32.mxu0 %v499
    %847 = vmatmul.mubr.f32.gmra.mxu0 %v498
    %v848 = vpop.f32.mrf.mxu0
    %v849 = vadd.f32 %v704, %v848
    %v850 = vpop.f32.mrf.mxu0
    %851 = vmatprep.mubr.f32.mxu0 %v503
    %852 = vmatmul.mubr.f32.gmra.mxu0 %v502
    %v853 = vpop.f32.mrf.mxu0
    %v854 = vadd.f32 %v709, %v853
    %v855 = vpop.f32.mrf.mxu0
    %856 = vmatprep.mubr.f32.mxu0 %v507
    %857 = vmatmul.mubr.f32.gmra.mxu0 %v506
    %v858 = vpop.f32.mrf.mxu0
    %v859 = vadd.f32 %v714, %v858
    %v860 = vpop.f32.mrf.mxu0
    %861 = vmatprep.mubr.f32.mxu0 %v511
    %862 = vmatmul.mubr.f32.gmra.mxu0 %v510
    %v863 = vpop.f32.mrf.mxu0
    %v864 = vadd.f32 %v719, %v863
    %v865 = vpop.f32.mrf.mxu0
    %866 = vmatprep.mubr.f32.mxu0 %v515
    %867 = vmatmul.mubr.f32.gmra.mxu0 %v514
    %v868 = vpop.f32.mrf.mxu0
    %v869 = vadd.f32 %v724, %v868
    %v870 = vpop.f32.mrf.mxu0
    %871 = vmatprep.mubr.f32.mxu0 %v519
    %872 = vmatmul.mubr.f32.gmra.mxu0 %v518
    %v873 = vpop.f32.mrf.mxu0
    %v874 = vadd.f32 %v729, %v873
    %v875 = vpop.f32.mrf.mxu0
    %876 = vmatprep.mubr.f32.mxu0 %v523
    %877 = vmatmul.mubr.f32.gmra.mxu0 %v522
    %v878 = vpop.f32.mrf.mxu0
    %v879 = vadd.f32 %v734, %v878
    %v880 = vpop.f32.mrf.mxu0
    %881 = vmatprep.mubr.f32.mxu0 %v527
    %882 = vmatmul.mubr.f32.gmra.mxu0 %v526
    %v883 = vpop.f32.mrf.mxu0
    %v884 = vadd.f32 %v739, %v883
    %v885 = vpop.f32.mrf.mxu0
    %886 = vmatprep.mubr.f32.mxu0 %v531
    %887 = vmatmul.mubr.f32.gmra.mxu0 %v530
    %v888 = vpop.f32.mrf.mxu0
    %v889 = vadd.f32 %v744, %v888
    %v890 = vpop.f32.mrf.mxu0
    %891 = vmatprep.mubr.f32.mxu0 %v535
    %892 = vmatmul.mubr.f32.gmra.mxu0 %v534
    %v893 = vpop.f32.mrf.mxu0
    %v894 = vadd.f32 %v749, %v893
    %v895 = vpop.f32.mrf.mxu0
    %896 = vdwg.mxu0
    %v897 = vmax.f32 %v819, 0.0
    %v898 = vmax.f32 %v824, 0.0
    %v899 = vmax.f32 %v829, 0.0
    %v900 = vmax.f32 %v834, 0.0
    %v901 = vmax.f32 %v839, 0.0
    %v902 = vmax.f32 %v844, 0.0
    %v903 = vmax.f32 %v849, 0.0
    %v904 = vmax.f32 %v854, 0.0
    %v905 = vmax.f32 %v859, 0.0
    %v906 = vmax.f32 %v864, 0.0
    %v907 = vmax.f32 %v869, 0.0
    %v908 = vmax.f32 %v874, 0.0
    %v909 = vmax.f32 %v879, 0.0
    %v910 = vmax.f32 %v884, 0.0
    %v911 = vmax.f32 %v889, 0.0
    %v912 = vmax.f32 %v894, 0.0
    %v913 = vld [vmem:[%s5] sm:$0x1]
    %v915 = vlaneseq
    %v916 = vshrl.u32 %v915, 7
    %v917 = vsub.s32 0, %v916
    %v918 = vrot.slane %v913, %v917
    %v920 = vmul.f32 %v897, %v918
    %v921 = vmul.f32 %v898, %v918
    %v922 = vmul.f32 %v899, %v918
    %v923 = vmul.f32 %v900, %v918
    %v924 = vmul.f32 %v901, %v918
    %v925 = vmul.f32 %v902, %v918
    %v926 = vmul.f32 %v903, %v918
    %v927 = vmul.f32 %v904, %v918
    %v928 = vmul.f32 %v905, %v918
    %v929 = vmul.f32 %v906, %v918
    %v930 = vmul.f32 %v907, %v918
    %v931 = vmul.f32 %v908, %v918
    %v932 = vmul.f32 %v909, %v918
    %v933 = vmul.f32 %v910, %v918
    %v934 = vmul.f32 %v911, %v918
    %v935 = vmul.f32 %v912, %v918
    %936 = vadd.xlane.f32.xlu0 %v920
    %v937 = vpop.xlane.xlu0 %936
    %938 = vadd.xlane.f32.xlu0 %v921
    %v939 = vpop.xlane.xlu0 %938
    %940 = vadd.xlane.f32.xlu0 %v922
    %v941 = vpop.xlane.xlu0 %940
    %942 = vadd.xlane.f32.xlu0 %v923
    %v943 = vpop.xlane.xlu0 %942
    %944 = vadd.xlane.f32.xlu0 %v924
    %v945 = vpop.xlane.xlu0 %944
    %946 = vadd.xlane.f32.xlu0 %v925
    %v947 = vpop.xlane.xlu0 %946
    %948 = vadd.xlane.f32.xlu0 %v926
    %v949 = vpop.xlane.xlu0 %948
    %950 = vadd.xlane.f32.xlu0 %v927
    %v951 = vpop.xlane.xlu0 %950
    %952 = vadd.xlane.f32.xlu0 %v928
    %v953 = vpop.xlane.xlu0 %952
    %954 = vadd.xlane.f32.xlu0 %v929
    %v955 = vpop.xlane.xlu0 %954
    %956 = vadd.xlane.f32.xlu0 %v930
    %v957 = vpop.xlane.xlu0 %956
    %958 = vadd.xlane.f32.xlu0 %v931
    %v959 = vpop.xlane.xlu0 %958
    %960 = vadd.xlane.f32.xlu0 %v932
    %v961 = vpop.xlane.xlu0 %960
    %962 = vadd.xlane.f32.xlu0 %v933
    %v963 = vpop.xlane.xlu0 %962
    %964 = vadd.xlane.f32.xlu0 %v934
    %v965 = vpop.xlane.xlu0 %964
    %966 = vadd.xlane.f32.xlu0 %v935
    %v967 = vpop.xlane.xlu0 %966
    %v968 = vld [vmem:[#allocation2] sm:$0x1]
    %v970 = vlaneseq
    %v971 = vshrl.u32 %v970, 7
    %v972 = vsub.s32 0, %v971
    %v973 = vrot.slane %v968, %v972
    %v975 = vadd.f32 %v937, %v973
    %v976 = vadd.f32 %v939, %v973
    %v977 = vadd.f32 %v941, %v973
    %v978 = vadd.f32 %v943, %v973
    %v979 = vadd.f32 %v945, %v973
    %v980 = vadd.f32 %v947, %v973
    %v981 = vadd.f32 %v949, %v973
    %v982 = vadd.f32 %v951, %v973
    %v983 = vadd.f32 %v953, %v973
    %v984 = vadd.f32 %v955, %v973
    %v985 = vadd.f32 %v957, %v973
    %v986 = vadd.f32 %v959, %v973
    %v987 = vadd.f32 %v961, %v973
    %v988 = vadd.f32 %v963, %v973
    %v989 = vadd.f32 %v965, %v973
    %v990 = vadd.f32 %v967, %v973
    %vm991 = vcmask 7168
    %992 = vst.msk [vmem:[%s7] sm:$0xff] %vm991, %v975
    %993 = vst.msk [vmem:[%s7 + $0x8] sm:$0xff] %vm991, %v976
    %994 = vst.msk [vmem:[%s7 + $0x10] sm:$0xff] %vm991, %v977
    %995 = vst.msk [vmem:[%s7 + $0x18] sm:$0xff] %vm991, %v978
    %996 = vst.msk [vmem:[%s7 + $0x20] sm:$0xff] %vm991, %v979
    %997 = vst.msk [vmem:[%s7 + $0x28] sm:$0xff] %vm991, %v980
    %998 = vst.msk [vmem:[%s7 + $0x30] sm:$0xff] %vm991, %v981
    %999 = vst.msk [vmem:[%s7 + $0x38] sm:$0xff] %vm991, %v982
    %1000 = vst.msk [vmem:[%s7 + $0x40] sm:$0xff] %vm991, %v983
    %1001 = vst.msk [vmem:[%s7 + $0x48] sm:$0xff] %vm991, %v984
    %1002 = vst.msk [vmem:[%s7 + $0x50] sm:$0xff] %vm991, %v985
    %1003 = vst.msk [vmem:[%s7 + $0x58] sm:$0xff] %vm991, %v986
    %1004 = vst.msk [vmem:[%s7 + $0x60] sm:$0xff] %vm991, %v987
    %1005 = vst.msk [vmem:[%s7 + $0x68] sm:$0xff] %vm991, %v988
    %1006 = vst.msk [vmem:[%s7 + $0x70] sm:$0xff] %vm991, %v989
    %1007 = vst.msk [vmem:[%s7 + $0x78] sm:$0xff] %vm991, %v990
    // Predicated region
    $region34: #{tpu_custom_call.1} parent=1 // pred_check
      _
    $region35: #{tpu_custom_call.1} parent=1 // pred_check_branch
      %1009 = sbr.rel (0) target = $region37
    $region36: #{tpu_custom_call.1} parent=1 // pred_region
      _
    $region37: #{tpu_custom_call.1} parent=1 // pred_fallthru
      _
    // Predicated region
    $region38: #{tpu_custom_call.1} parent=1 // pred_check
      _
    $region39: #{tpu_custom_call.1} parent=1 // pred_check_branch
      %1011 = sbr.rel (0) target = $region41
    $region40: #{tpu_custom_call.1} parent=1 // pred_region
      _
    $region41: #{tpu_custom_call.1} parent=1 // pred_fallthru
      _
    %1012 = vsyncpa [#allocation4], 1

</llo_original>
